<compile_context>
chip_gen: v7x
topology: tpu7x:2x2x1
jax: 0.10.0
libtpu: 0.0.40
codegen_flags: <defaults>
</compile_context>

<pallas_src>
import jax
import jax.numpy as jnp
from jax.experimental import pallas as pl
from jax.experimental.pallas import tpu as pltpu


def _round_up(x, m):
    return ((x + m - 1) // m) * m


def _gmf_kernel(u_ref, v_ref, w_ref, b_ref, out_ref):
    # u_ref, v_ref : (TBr, L) f32 VMEM   L = P*D (lane-dense; P batch rows per row)
    # w_ref        : (L, P)   f32 VMEM   block-diagonal folded Linear weight (resident)
    # b_ref        : (1,)     f32 SMEM   Linear bias (scalar)
    # out_ref      : (TBr, P) f32 VMEM   logits; [r, c] is batch element r*P + c
    prod = u_ref[...] * v_ref[...]                                    # VPU
    out_ref[...] = jnp.dot(prod, w_ref[...],
                           preferred_element_type=jnp.float32) + b_ref[0]  # MXU


@jax.jit
def gmf_forward(user_indices, item_indices, user_table, item_table, weight, bias):
    """Pallas GMF forward.

    user_indices, item_indices : int32 (B,)
    user_table : f32 (num_users, D)
    item_table : f32 (num_items, D)
    weight     : f32 (1, D)   (torch Linear weight, out_features=1)
    bias       : f32 (1,)     (torch Linear bias)
    returns    : f32 (B, 1)
    """
    B = user_indices.shape[0]
    D = user_table.shape[1]
    if B == 0:
        return jnp.zeros((0, 1), jnp.float32)

    # Pack P batch rows per 128-wide lane row when D divides 128.
    P = 128 // D if (D <= 128 and 128 % D == 0) else 1
    L = P * D

    # Pad indices (not activations) so the gather directly produces (B_pad, D),
    # which reshapes row-major into lane-dense (R, L) with R a multiple of 8.
    B_pad = _round_up(B, P * 8)
    if B_pad != B:
        user_indices = jnp.pad(user_indices, (0, B_pad - B))
        item_indices = jnp.pad(item_indices, (0, B_pad - B))
    R = B_pad // P

    # TODO(synk): when the embedding tables are small enough for VMEM, the
    # gather itself could be fused in-kernel via scalar-prefetched indices;
    # kept in XLA here so arbitrarily large tables remain supported.
    u = user_table[user_indices].astype(jnp.float32).reshape(R, L)
    v = item_table[item_indices].astype(jnp.float32).reshape(R, L)

    # Fold the Linear weight into a block-diagonal (L, P) matrix: column c
    # holds w in rows c*D .. c*D+D-1, so out[r, c] == logit of batch row r*P+c.
    w_col = weight.reshape(D, 1).astype(jnp.float32)
    w_bd = jnp.kron(jnp.eye(P, dtype=jnp.float32), w_col)            # (L, P)
    b = bias.reshape(1).astype(jnp.float32)

    # Batch tiling: big tiles amortize per-step overhead; force >=2 grid steps
    # when there is enough work so the "parallel" axis feeds both v7x cores.
    TBR_MAX = 4096                       # rows/step -> 16K batch elems, ~4 MiB input
    tbr = min(TBR_MAX, R)
    if R >= 16:
        tbr = min(tbr, _round_up((R + 1) // 2, 8))
    tbr = max(tbr, 8)
    grid = (pl.cdiv(R, tbr),)            # ragged last block: clamped reads, masked writes

    out = pl.pallas_call(
        _gmf_kernel,
        out_shape=jax.ShapeDtypeStruct((R, P), jnp.float32),
        grid=grid,
        in_specs=[
            pl.BlockSpec((tbr, L), lambda i: (i, 0)),
            pl.BlockSpec((tbr, L), lambda i: (i, 0)),
            pl.BlockSpec((L, P), lambda i: (0, 0)),
            pl.BlockSpec(memory_space=pltpu.MemorySpace.SMEM),
        ],
        out_specs=pl.BlockSpec((tbr, P), lambda i: (i, 0)),
        compiler_params=pltpu.CompilerParams(
            dimension_semantics=("parallel",),
            vmem_limit_bytes=32 * 1024 * 1024),
    )(u, v, w_bd, b)

    return out.reshape(B_pad, 1)[:B]


if __name__ == "__main__":
    # config (small, synthetic)
    num_users, num_items, latent_dim = 64, 100, 32
    batch = 8

    key = jax.random.PRNGKey(0)
    k_u, k_i, k_w, k_b, k_ui, k_ii = jax.random.split(key, 6)

    # torch.nn.Embedding default init: N(0, 1)
    user_table = jax.random.normal(k_u, (num_users, latent_dim), jnp.float32)
    item_table = jax.random.normal(k_i, (num_items, latent_dim), jnp.float32)
    # torch.nn.Linear(latent_dim, 1) params: weight (1, D), bias (1,)
    bound = 1.0 / (latent_dim ** 0.5)
    weight = jax.random.uniform(k_w, (1, latent_dim), jnp.float32, -bound, bound)
    bias = jax.random.uniform(k_b, (1,), jnp.float32, -bound, bound)

    user_indices = jax.random.randint(k_ui, (batch,), 0, num_users, jnp.int32)
    item_indices = jax.random.randint(k_ii, (batch,), 0, num_items, jnp.int32)

    out = gmf_forward(user_indices, item_indices,
                      user_table, item_table, weight, bias)
    out = jax.block_until_ready(out)

    # plain-JAX reference for sanity
    u = user_table[user_indices]
    v = item_table[item_indices]
    ref = (u * v) @ weight.T + bias
    assert out.shape == (batch, 1)
    assert jnp.allclose(out, ref, atol=1e-5, rtol=1e-5)

    print("KERNEL_OK")
</pallas_src>

<mosaic_0001>
module attributes {stable_mosaic.version = 11 : i64} {
  func.func @_gmf_kernel(%arg0: i32, %arg1: memref<8x128xf32, #tpu.memory_space<vmem>>, %arg2: memref<8x128xf32, #tpu.memory_space<vmem>>, %arg3: memref<128x4xf32, #tpu.memory_space<vmem>>, %arg4: memref<1xf32, #tpu.memory_space<smem>>, %arg5: memref<8x4xf32, #tpu.memory_space<vmem>>) attributes {dimension_semantics = [#tpu.dimension_semantics<parallel>], iteration_bounds = array<i64: 1>, scalar_prefetch = 0 : i64, scratch_operands = 0 : i64, tpu.core_type = #tpu.core_type<tc>, window_params = [{transform_indices = @transform_0, window_bounds = array<i64: 8, 128>}, {transform_indices = @transform_1, window_bounds = array<i64: 8, 128>}, {pipeline_mode = #tpu.pipeline_mode<synchronous>, transform_indices = @transform_2, window_bounds = array<i64: 128, 4>}, {transform_indices = @transform_3, window_bounds = array<i64: 1>}, {transform_indices = @transform_4, window_bounds = array<i64: 8, 4>}]} {
    %c0 = arith.constant 0 : index
    %c0_0 = arith.constant 0 : index
    %0 = vector.load %arg1[%c0, %c0_0] : memref<8x128xf32, #tpu.memory_space<vmem>>, vector<8x128xf32>
    %c0_1 = arith.constant 0 : index
    %c0_2 = arith.constant 0 : index
    %1 = vector.load %arg2[%c0_1, %c0_2] : memref<8x128xf32, #tpu.memory_space<vmem>>, vector<8x128xf32>
    %2 = arith.mulf %0, %1 : vector<8x128xf32>
    %c0_3 = arith.constant 0 : index
    %c0_4 = arith.constant 0 : index
    %3 = vector.load %arg3[%c0_3, %c0_4] : memref<128x4xf32, #tpu.memory_space<vmem>>, vector<128x4xf32>
    %cst = arith.constant dense<0.000000e+00> : vector<8x4xf32>
    %4 = tpu.matmul %2, %3, %cst {dimension_numbers = #tpu.dot_dimension_numbers<[1], [0], [0], [1], [0, 0, 1, 1], [], []>} : vector<8x128xf32>, vector<128x4xf32>, vector<8x4xf32> -> vector<8x4xf32>
    %c0_5 = arith.constant 0 : index
    %5 = memref.load %arg4[%c0_5] : memref<1xf32, #tpu.memory_space<smem>>
    %6 = vector.broadcast %5 : f32 to vector<8x4xf32>
    %7 = arith.addf %4, %6 : vector<8x4xf32>
    %c0_6 = arith.constant 0 : index
    %c0_7 = arith.constant 0 : index
    %8 = vector.load %arg5[%c0_6, %c0_7] : memref<8x4xf32, #tpu.memory_space<vmem>>, vector<8x4xf32>
    tpu.vector_store %arg5[%c0_6, %c0_7], %7 {strides = array<i32>} : memref<8x4xf32, #tpu.memory_space<vmem>>, vector<8x4xf32>,
    return
  }
  func.func @transform_0(%arg0: i32) -> (i32, i32) {
    %c0_i32 = arith.constant 0 : i32
    %c0_i32_0 = arith.constant 0 : i32
    return %arg0, %c0_i32 : i32, i32
  }
  func.func @transform_1(%arg0: i32) -> (i32, i32) {
    %c0_i32 = arith.constant 0 : i32
    %c0_i32_0 = arith.constant 0 : i32
    return %arg0, %c0_i32 : i32, i32
  }
  func.func @transform_2(%arg0: i32) -> (i32, i32) {
    %c0_i32 = arith.constant 0 : i32
    %c0_i32_0 = arith.constant 0 : i32
    %c0_i32_1 = arith.constant 0 : i32
    return %c0_i32, %c0_i32_0 : i32, i32
  }
  func.func @transform_3(%arg0: i32) -> i32 {
    %c0_i32 = arith.constant 0 : i32
    %c0_i32_0 = arith.constant 0 : i32
    return %c0_i32 : i32
  }
  func.func @transform_4(%arg0: i32) -> (i32, i32) {
    %c0_i32 = arith.constant 0 : i32
    %c0_i32_0 = arith.constant 0 : i32
    return %arg0, %c0_i32 : i32, i32
  }
}

</mosaic_0001>

<llo_original>
// kernel: gmf_forward.1
$region0: #{gmf_forward.1}
  #allocation0 [shape = 'u32[]', space=smem, size = 0x4, offset = 0x4, fixed_abs, tag = 'smem constant byte address 0x4 - core index']
  #allocation1 [shape = 'u32[144,128]{1,0:T(1,128)}', space=vmem, size = 0x12000, scoped, tag = 'internal scratch']
  #allocation2 [shape = 'f32[1]{0:T(128)S(6)}', space=smem, size = 0x200, scoped, tag = 'scoped memory for gmf_forward.1']
  %s0 = inlined_call_operand.vmem [shape: f32[8,128], index: 0, kind: input, shape index: {}]
  %s1 = inlined_call_operand.vmem [shape: f32[8,128], index: 1, kind: input, shape index: {}]
  %s2 = inlined_call_operand.vmem [shape: f32[128,4], index: 2, kind: input, shape index: {}]
  %s3 = inlined_call_operand.<no memory space> [shape: f32[1], index: 3, kind: input, shape index: {}]
  %s4 = inlined_call_operand.vmem [shape: f32[8,4], index: 4, kind: output, shape index: {}]
  %s5 = sld [smem:[#allocation0]]
  $region26: #{gmf_forward.1} parent=0
    _
  %s7 = ssub.s32 1, %s5
  %s8 = scalar_select 0, %s7, %s5
  %9 = sst [smem:[#allocation2]] %s3
  // Predicated region
  $region2: #{gmf_forward.1} parent=0 // pred_check
    _
  $region3: #{gmf_forward.1} parent=0 // pred_check_branch
    %11 = sbr.rel (0) target = $region5
  $region4: #{gmf_forward.1} parent=0 // pred_region
    _
  $region5: #{gmf_forward.1} parent=0 // pred_fallthru
    _
  // Predicated region
  $region6: #{gmf_forward.1} parent=0 // pred_check
    _
  $region7: #{gmf_forward.1} parent=0 // pred_check_branch
    %13 = sbr.rel (0) target = $region9
  $region8: #{gmf_forward.1} parent=0 // pred_region
    _
  $region9: #{gmf_forward.1} parent=0 // pred_fallthru
    _
  // Predicated region
  $region10: #{gmf_forward.1} parent=0 // pred_check
    _
  $region11: #{gmf_forward.1} parent=0 // pred_check_branch
    %15 = sbr.rel (0) target = $region13
  $region12: #{gmf_forward.1} parent=0 // pred_region
    _
  $region13: #{gmf_forward.1} parent=0 // pred_fallthru
    _
  // Predicated region
  $region14: #{gmf_forward.1} parent=0 // pred_check
    _
  $region15: #{gmf_forward.1} parent=0 // pred_check_branch
    %17 = sbr.rel (0) target = $region17
  $region16: #{gmf_forward.1} parent=0 // pred_region
    _
  $region17: #{gmf_forward.1} parent=0 // pred_fallthru
    _
  %v18 = vld [vmem:[%s0] sm:$0xff]
  %v19 = vld [vmem:[%s1] sm:$0xff]
  %v20 = vmul.f32 %v18, %v19
  %v21 = vld [vmem:[%s2] sm:$0xff]
  %v22 = vld [vmem:[%s2 + $0x8] sm:$0xff]
  %v23 = vld [vmem:[%s2 + $0x10] sm:$0xff]
  %v24 = vld [vmem:[%s2 + $0x18] sm:$0xff]
  %v25 = vld [vmem:[%s2 + $0x20] sm:$0xff]
  %v26 = vld [vmem:[%s2 + $0x28] sm:$0xff]
  %v27 = vld [vmem:[%s2 + $0x30] sm:$0xff]
  %v28 = vld [vmem:[%s2 + $0x38] sm:$0xff]
  %v29 = vld [vmem:[%s2 + $0x40] sm:$0xff]
  %v30 = vld [vmem:[%s2 + $0x48] sm:$0xff]
  %v31 = vld [vmem:[%s2 + $0x50] sm:$0xff]
  %v32 = vld [vmem:[%s2 + $0x58] sm:$0xff]
  %v33 = vld [vmem:[%s2 + $0x60] sm:$0xff]
  %v34 = vld [vmem:[%s2 + $0x68] sm:$0xff]
  %v35 = vld [vmem:[%s2 + $0x70] sm:$0xff]
  %v36 = vld [vmem:[%s2 + $0x78] sm:$0xff]
  %s37 = sld [smem:[#allocation2]]
  %v38 = vstv %s37
  %39 = vmatprep.subr.mxu0 0.0
  %40 = vmatpush1.msra.mxu0 %v21
  %41 = vmatprep.subr.mxu0 0.0
  %42 = vmatpush1.msra.mxu0 %v22
  %43 = vmatprep.subr.mxu0 0.0
  %44 = vmatpush1.msra.mxu0 %v23
  %45 = vmatprep.subr.mxu0 0.0
  %46 = vmatpush1.msra.mxu0 %v24
  %47 = vmatprep.subr.mxu0 0.0
  %48 = vmatpush1.msra.mxu0 %v25
  %49 = vmatprep.subr.mxu0 0.0
  %50 = vmatpush1.msra.mxu0 %v26
  %51 = vmatprep.subr.mxu0 0.0
  %52 = vmatpush1.msra.mxu0 %v27
  %53 = vmatprep.subr.mxu0 0.0
  %54 = vmatpush1.msra.mxu0 %v28
  %55 = vmatprep.subr.mxu0 0.0
  %56 = vmatpush1.msra.mxu0 %v29
  %57 = vmatprep.subr.mxu0 0.0
  %58 = vmatpush1.msra.mxu0 %v30
  %59 = vmatprep.subr.mxu0 0.0
  %60 = vmatpush1.msra.mxu0 %v31
  %61 = vmatprep.subr.mxu0 0.0
  %62 = vmatpush1.msra.mxu0 %v32
  %63 = vmatprep.subr.mxu0 0.0
  %64 = vmatpush1.msra.mxu0 %v33
  %65 = vmatprep.subr.mxu0 0.0
  %66 = vmatpush1.msra.mxu0 %v34
  %67 = vmatprep.subr.mxu0 0.0
  %68 = vmatpush1.msra.mxu0 %v35
  %69 = vmatprep.subr.mxu0 0.0
  %70 = vmatpush1.msra.mxu0 %v36
  %71 = vmatprep.subr.mxu0 0.0
  %72 = vmatpush1.msra.mxu0 0.0
  %73 = vmatprep.subr.mxu0 0.0
  %74 = vmatpush1.msra.mxu0 0.0
  %75 = vmatprep.subr.mxu0 0.0
  %76 = vmatpush1.msra.mxu0 0.0
  %77 = vmatprep.subr.mxu0 0.0
  %78 = vmatpush1.msra.mxu0 0.0
  %79 = vmatprep.subr.mxu0 0.0
  %80 = vmatpush1.msra.mxu0 0.0
  %81 = vmatprep.subr.mxu0 0.0
  %82 = vmatpush1.msra.mxu0 0.0
  %83 = vmatprep.subr.mxu0 0.0
  %84 = vmatpush1.msra.mxu0 0.0
  %85 = vmatprep.subr.mxu0 0.0
  %86 = vmatpush1.msra.mxu0 0.0
  %87 = vmatprep.subr.mxu0 0.0
  %88 = vmatpush1.msra.mxu0 0.0
  %89 = vmatprep.subr.mxu0 0.0
  %90 = vmatpush1.msra.mxu0 0.0
  %91 = vmatprep.subr.mxu0 0.0
  %92 = vmatpush1.msra.mxu0 0.0
  %93 = vmatprep.subr.mxu0 0.0
  %94 = vmatpush1.msra.mxu0 0.0
  %95 = vmatprep.subr.mxu0 0.0
  %96 = vmatpush1.msra.mxu0 0.0
  %97 = vmatprep.subr.mxu0 0.0
  %98 = vmatpush1.msra.mxu0 0.0
  %99 = vmatprep.subr.mxu0 0.0
  %100 = vmatpush1.msra.mxu0 0.0
  %101 = vmatprep.subr.mxu0 0.0
  %102 = vmatpush1.msra.mxu0 0.0
  %103 = vmatprep.mubr.f32.mxu0 0.0
  %104 = vmatmul.mubr.f32.gmra.mrb[0].mxu0 %v20
  %v105 = vpop.f32.mrb[0].mxu0
  %v106 = vadd.f32 %v38, %v105
  %v107 = vpop.f32.mrb[0].mxu0
  %108 = vdwg.mxu0
  %vm109 = vcmask 31744
  %110 = vst.msk [vmem:[%s4] sm:$0xff] %vm109, %v106
  // Predicated region
  $region18: #{gmf_forward.1} parent=0 // pred_check
    _
  $region19: #{gmf_forward.1} parent=0 // pred_check_branch
    %112 = sbr.rel (0) target = $region21
  $region20: #{gmf_forward.1} parent=0 // pred_region
    _
  $region21: #{gmf_forward.1} parent=0 // pred_fallthru
    _
  // Predicated region
  $region22: #{gmf_forward.1} parent=0 // pred_check
    _
  $region23: #{gmf_forward.1} parent=0 // pred_check_branch
    %114 = sbr.rel (0) target = $region25
  $region24: #{gmf_forward.1} parent=0 // pred_region
    _
  $region25: #{gmf_forward.1} parent=0 // pred_fallthru
    _

</llo_original>
